<compile_context>
chip_gen: v7x
topology: tpu7x:2x2x1
jax: 0.10.0
libtpu: 0.0.40
codegen_flags: <defaults>
</compile_context>

<pallas_src>
import functools

import jax
import jax.numpy as jnp
from jax import lax
from jax.experimental import pallas as pl
from jax.experimental.pallas import tpu as pltpu


def _differential_daily_kernel(
    ex_ref, tx_ref, ty_ref, mask_ref, tri_ref, slab_ref, out_ref, *,
    bt, t_x, t_y, d_feat, f_time, h_enc, h_dec, r_dec, r_mo, r_bias,
    compute_dtype,
):
    f32 = jnp.float32
    cdt = compute_dtype
    D, F, H, H2 = d_feat, f_time, h_enc, h_dec

    ex = ex_ref[...]                                     # (Bt*T_x, D) f32
    tx = tx_ref[...]                                     # (Bt*T_x, F) cdt
    ty = ty_ref[...]                                     # (Bt*T_y, F) cdt

    # Static views into the fused weight/bias slab (single constant input).
    slab = slab_ref[...]
    w_enc = slab[0:D + F, 0:H].astype(cdt)               # [w_e ; w_tx]
    w_dec = slab[r_dec:r_dec + H + F, 0:H2].astype(cdt)  # [w_c ; w_ty]
    w_mo = slab[r_mo:r_mo + H2, 0:2 * D].astype(cdt)     # [w_m | w_o]
    b_enc = slab[r_bias:r_bias + 1, 0:H]                 # biases stay f32
    b_dec = slab[r_bias + 1:r_bias + 2, 0:H2]
    b_mo = slab[r_bias + 2:r_bias + 3, 0:2 * D]

    # Temporal differencing: sublane roll (XLU slot) + hoisted first-row mask.
    dif = (ex - pltpu.roll(ex, shift=1, axis=0)) * mask_ref[...]   # f32

    # Encoder: fused [dif | time_x] contraction (one MXU push).
    enc_in = jnp.concatenate([dif.astype(cdt), tx], axis=1)        # (N_x, D+F)
    enc = jnp.maximum(
        jnp.dot(enc_in, w_enc, preferred_element_type=f32) + b_enc, 0.0)

    # Mean-pool over each sequence's history + replicate over the horizon
    # (reduce + broadcast, no matmul).
    ctx = jnp.sum(enc.reshape(bt, t_x, H), axis=1, keepdims=True) * (1.0 / t_x)
    ctxh = jnp.broadcast_to(ctx, (bt, t_y, H)).reshape(bt * t_y, H)

    # Decoder: fused [ctx | time_y] contraction (one MXU push).
    dec_in = jnp.concatenate([ctxh.astype(cdt), ty], axis=1)       # (N_y, H+F)
    dec = jnp.maximum(
        jnp.dot(dec_in, w_dec, preferred_element_type=f32) + b_dec, 0.0)

    # Fused output head: columns [0:D] = mean increments, [D:2D] = channel 1.
    head = jnp.dot(dec.astype(cdt), w_mo, preferred_element_type=f32) + b_mo

    # Per-sequence cumulative sum of the mean increments only (f32).
    cum_m = jnp.dot(tri_ref[...], head[:, :D], preferred_element_type=f32)

    # Last observed level per sequence (strided read), replicated over horizon.
    last = ex_ref[pl.ds(t_x - 1, bt, stride=t_x), :]               # (Bt, D)
    lvl = jnp.broadcast_to(last[:, None, :], (bt, t_y, D)).reshape(bt * t_y, D)

    out_ref[...] = jnp.concatenate([cum_m + lvl, head[:, D:]], axis=1)


def differential_daily(energy_x, time_x, time_y, params, *,
                       block_batch=4, compute_dtype=jnp.float32):
    f32 = jnp.float32
    B, T_x, D = energy_x.shape
    _, T_y, F = time_y.shape
    H = params["w_e"].shape[1]
    H2 = params["w_c"].shape[1]

    # Pick a batch tile so blocks satisfy the (8, 128) sublane constraint.
    Bt = max(1, min(block_batch, B))
    while (Bt * T_x) % 8 != 0 or (Bt * T_y) % 8 != 0:
        Bt += 1
    B_pad = -(-B // Bt) * Bt
    if B_pad != B:
        pad_b = B_pad - B
        energy_x = jnp.pad(energy_x, ((0, pad_b), (0, 0), (0, 0)))
        time_x = jnp.pad(time_x, ((0, pad_b), (0, 0), (0, 0)))
        time_y = jnp.pad(time_y, ((0, pad_b), (0, 0), (0, 0)))
    n_blocks = B_pad // Bt
    N_x, N_y = Bt * T_x, Bt * T_y

    # Flatten batch into the matmul M dimension (free row-major reshapes).
    # Time features pre-cast to compute_dtype (halves their DMA when bf16).
    ex2 = energy_x.reshape(B_pad * T_x, D).astype(f32)
    tx2 = time_x.reshape(B_pad * T_x, F).astype(compute_dtype)
    ty2 = time_y.reshape(B_pad * T_y, F).astype(compute_dtype)

    # Hoisted, tiny, loop-invariant structural constants.
    t_of_x = jnp.arange(N_x) % T_x
    mask = (t_of_x > 0).astype(f32)[:, None]                         # (N_x, 1)
    iy = jnp.arange(N_y)
    tri = (((iy[:, None] // T_y) == (iy[None, :] // T_y))
           & (iy[None, :] <= iy[:, None])).astype(f32)               # (N_y, N_y)

    # One padded f32 weight/bias slab (single constant input, static slices).
    def _rup8(n):
        return -(-n // 8) * 8

    r_dec = _rup8(D + F)
    r_mo = r_dec + _rup8(H + F)
    r_bias = r_mo + _rup8(H2)
    R = _rup8(r_bias + 3)
    W = max(H, H2, 2 * D)

    w_enc = jnp.concatenate([params["w_e"], params["w_tx"]], axis=0).astype(f32)
    w_dec = jnp.concatenate([params["w_c"], params["w_ty"]], axis=0).astype(f32)
    w_mo = jnp.concatenate([params["w_m"], params["w_o"]], axis=1).astype(f32)
    b_mo = jnp.concatenate([params["b_m"].reshape(D),
                            params["b_o"].reshape(D)]).astype(f32)

    slab = jnp.zeros((R, W), f32)
    slab = slab.at[0:D + F, 0:H].set(w_enc)
    slab = slab.at[r_dec:r_dec + H + F, 0:H2].set(w_dec)
    slab = slab.at[r_mo:r_mo + H2, 0:2 * D].set(w_mo)
    slab = slab.at[r_bias, 0:H].set(params["b_enc"].reshape(H).astype(f32))
    slab = slab.at[r_bias + 1, 0:H2].set(params["b_dec"].reshape(H2).astype(f32))
    slab = slab.at[r_bias + 2, 0:2 * D].set(b_mo)

    grid_spec = pltpu.PrefetchScalarGridSpec(
        num_scalar_prefetch=0,
        grid=(n_blocks,),
        in_specs=[
            pl.BlockSpec((N_x, D), lambda b: (b, 0)),
            pl.BlockSpec((N_x, F), lambda b: (b, 0)),
            pl.BlockSpec((N_y, F), lambda b: (b, 0)),
            pl.BlockSpec(mask.shape, lambda b: (0, 0)),
            pl.BlockSpec(tri.shape, lambda b: (0, 0)),
            pl.BlockSpec(slab.shape, lambda b: (0, 0)),
        ],
        out_specs=pl.BlockSpec((N_y, 2 * D), lambda b: (b, 0)),
    )

    # Advisory cost hint (real, post-restructuring flops/bytes).
    macs_per_block = (N_x * (D + F) * H + N_y * (H + F) * H2
                      + N_y * H2 * 2 * D + N_y * N_y * D)
    bytes_accessed = int(
        ex2.size * 4 + tx2.size * tx2.dtype.itemsize
        + ty2.size * ty2.dtype.itemsize
        + B_pad * T_y * 2 * D * 4
        + (mask.size + tri.size + slab.size) * 4)
    cost = pl.CostEstimate(flops=2 * macs_per_block * n_blocks,
                           transcendentals=0, bytes_accessed=bytes_accessed)

    kernel = functools.partial(
        _differential_daily_kernel,
        bt=Bt, t_x=T_x, t_y=T_y, d_feat=D, f_time=F, h_enc=H, h_dec=H2,
        r_dec=r_dec, r_mo=r_mo, r_bias=r_bias, compute_dtype=compute_dtype)

    out2 = pl.pallas_call(
        kernel,
        out_shape=jax.ShapeDtypeStruct((B_pad * T_y, 2 * D), f32),
        grid_spec=grid_spec,
        compiler_params=pltpu.CompilerParams(
            dimension_semantics=("parallel",)),
        cost_estimate=cost,
    )(ex2, tx2, ty2, mask, tri, slab)

    # (B_pad*T_y, 2D) -> (B, T_y, 2, D): free row-major reshape, no concat.
    return out2.reshape(B_pad, T_y, 2, D)[:B]


# ---------------------- pure-JAX reference (for checking) ----------------------
def _inner_model_ref(dif_x, time_x, time_y, p):
    hp = lax.Precision.HIGHEST
    enc = jax.nn.relu(jnp.dot(dif_x, p["w_e"], precision=hp)
                      + jnp.dot(time_x, p["w_tx"], precision=hp) + p["b_enc"])
    ctx = jnp.mean(enc, axis=1, keepdims=True)
    dec = jax.nn.relu(jnp.dot(ctx, p["w_c"], precision=hp)
                      + jnp.dot(time_y, p["w_ty"], precision=hp) + p["b_dec"])
    mean_raw = jnp.dot(dec, p["w_m"], precision=hp) + p["b_m"]
    other = jnp.dot(dec, p["w_o"], precision=hp) + p["b_o"]
    return jnp.stack([mean_raw, other], axis=2)          # (B, T_y, 2, D)


def _differential_daily_ref(energy_x, time_x, time_y, p):
    dif_x = jnp.concatenate(
        [jnp.zeros_like(energy_x[:, :1]), energy_x[:, 1:] - energy_x[:, :-1]],
        axis=1)
    dif_y = _inner_model_ref(dif_x, time_x, time_y, p)
    means = jnp.cumsum(dif_y[:, :, 0], axis=1) + energy_x[:, -1][:, None, :]
    return jnp.concatenate([means[:, :, None, :], dif_y[:, :, 1:2, :]], axis=2)


if __name__ == "__main__":
    B, T_x, T_y, D, F, H, H2 = 16, 16, 8, 4, 4, 32, 32
    key = jax.random.PRNGKey(0)
    keys = jax.random.split(key, 13)

    energy_x = jax.random.normal(keys[0], (B, T_x, D), jnp.float32)
    time_x = jax.random.normal(keys[1], (B, T_x, F), jnp.float32)
    time_y = jax.random.normal(keys[2], (B, T_y, F), jnp.float32)

    s = 0.25
    params = {
        "w_e":  s * jax.random.normal(keys[3],  (D, H),  jnp.float32),
        "w_tx": s * jax.random.normal(keys[4],  (F, H),  jnp.float32),
        "b_enc": s * jax.random.normal(keys[5], (1, H),  jnp.float32),
        "w_c":  s * jax.random.normal(keys[6],  (H, H2), jnp.float32),
        "w_ty": s * jax.random.normal(keys[7],  (F, H2), jnp.float32),
        "b_dec": s * jax.random.normal(keys[8], (1, H2), jnp.float32),
        "w_m":  s * jax.random.normal(keys[9],  (H2, D), jnp.float32),
        "b_m":  s * jax.random.normal(keys[10], (1, D),  jnp.float32),
        "w_o":  s * jax.random.normal(keys[11], (H2, D), jnp.float32),
        "b_o":  s * jax.random.normal(keys[12], (1, D),  jnp.float32),
    }

    # f32 MXU path (exact); pass compute_dtype=jnp.bfloat16 on v6e/v7x for
    # bf16-operand / f32-accumulate MLP matmuls (use a looser tolerance then).
    out = differential_daily(energy_x, time_x, time_y, params, block_batch=4)
    out = jax.block_until_ready(out)

    ref = _differential_daily_ref(energy_x, time_x, time_y, params)
    assert out.shape == (B, T_y, 2, D), out.shape
    err = float(jnp.max(jnp.abs(out - ref)))
    assert jnp.allclose(out, ref, atol=1e-4, rtol=1e-4), f"max abs err {err}"
    print("KERNEL_OK")
</pallas_src>

<mosaic_0001>
module attributes {stable_mosaic.version = 11 : i64} {
  func.func @_differential_daily_kernel(%arg0: i32, %arg1: memref<64x4xf32, #tpu.memory_space<vmem>>, %arg2: memref<64x4xf32, #tpu.memory_space<vmem>>, %arg3: memref<32x4xf32, #tpu.memory_space<vmem>>, %arg4: memref<64x1xf32, #tpu.memory_space<vmem>>, %arg5: memref<32x32xf32, #tpu.memory_space<vmem>>, %arg6: memref<88x32xf32, #tpu.memory_space<vmem>>, %arg7: memref<32x8xf32, #tpu.memory_space<vmem>>) attributes {dimension_semantics = [#tpu.dimension_semantics<parallel>], iteration_bounds = array<i64: 4>, scalar_prefetch = 0 : i64, scratch_operands = 0 : i64, tpu.core_type = #tpu.core_type<tc>, window_params = [{transform_indices = @transform_0, window_bounds = array<i64: 64, 4>}, {transform_indices = @transform_1, window_bounds = array<i64: 64, 4>}, {transform_indices = @transform_2, window_bounds = array<i64: 32, 4>}, {pipeline_mode = #tpu.pipeline_mode<synchronous>, transform_indices = @transform_3, window_bounds = array<i64: 64, 1>}, {pipeline_mode = #tpu.pipeline_mode<synchronous>, transform_indices = @transform_4, window_bounds = array<i64: 32, 32>}, {pipeline_mode = #tpu.pipeline_mode<synchronous>, transform_indices = @transform_5, window_bounds = array<i64: 88, 32>}, {transform_indices = @transform_6, window_bounds = array<i64: 32, 8>}]} {
    %c0 = arith.constant 0 : index
    %c0_0 = arith.constant 0 : index
    %0 = vector.load %arg1[%c0, %c0_0] : memref<64x4xf32, #tpu.memory_space<vmem>>, vector<64x4xf32>
    %c0_1 = arith.constant 0 : index
    %c0_2 = arith.constant 0 : index
    %1 = vector.load %arg2[%c0_1, %c0_2] : memref<64x4xf32, #tpu.memory_space<vmem>>, vector<64x4xf32>
    %c0_3 = arith.constant 0 : index
    %c0_4 = arith.constant 0 : index
    %2 = vector.load %arg3[%c0_3, %c0_4] : memref<32x4xf32, #tpu.memory_space<vmem>>, vector<32x4xf32>
    %c0_5 = arith.constant 0 : index
    %c0_6 = arith.constant 0 : index
    %3 = vector.load %arg6[%c0_5, %c0_6] : memref<88x32xf32, #tpu.memory_space<vmem>>, vector<88x32xf32>
    %4 = vector.extract_strided_slice %3 {offsets = [0, 0], sizes = [8, 32], strides = [1, 1]} : vector<88x32xf32> to vector<8x32xf32>
    %5 = vector.extract_strided_slice %3 {offsets = [8, 0], sizes = [36, 32], strides = [1, 1]} : vector<88x32xf32> to vector<36x32xf32>
    %6 = vector.extract_strided_slice %3 {offsets = [48, 0], sizes = [32, 8], strides = [1, 1]} : vector<88x32xf32> to vector<32x8xf32>
    %7 = vector.extract_strided_slice %3 {offsets = [80, 0], sizes = [1, 32], strides = [1, 1]} : vector<88x32xf32> to vector<1x32xf32>
    %8 = vector.extract_strided_slice %3 {offsets = [81, 0], sizes = [1, 32], strides = [1, 1]} : vector<88x32xf32> to vector<1x32xf32>
    %9 = vector.extract_strided_slice %3 {offsets = [82, 0], sizes = [1, 8], strides = [1, 1]} : vector<88x32xf32> to vector<1x8xf32>
    %c1_i32 = arith.constant 1 : i32
    %10 = tpu.dynamic_rotate %0 by %c1_i32 dim 0 : vector<64x4xf32>, i32 -> vector<64x4xf32>
    %11 = arith.subf %0, %10 : vector<64x4xf32>
    %c0_7 = arith.constant 0 : index
    %c0_8 = arith.constant 0 : index
    %12 = vector.load %arg4[%c0_7, %c0_8] : memref<64x1xf32, #tpu.memory_space<vmem>>, vector<64x1xf32>
    %13 = vector.broadcast %12 : vector<64x1xf32> to vector<64x4xf32>
    %14 = arith.mulf %11, %13 : vector<64x4xf32>
    %15 = tpu.concatenate %14, %1 in 1 : vector<64x4xf32>, vector<64x4xf32> -> vector<64x8xf32>
    %cst = arith.constant dense<0.000000e+00> : vector<64x32xf32>
    %16 = tpu.matmul %15, %4, %cst {dimension_numbers = #tpu.dot_dimension_numbers<[1], [0], [0], [1], [0, 0, 1, 1], [], []>} : vector<64x8xf32>, vector<8x32xf32>, vector<64x32xf32> -> vector<64x32xf32>
    %17 = vector.broadcast %7 : vector<1x32xf32> to vector<64x32xf32>
    %18 = arith.addf %16, %17 : vector<64x32xf32>
    %cst_9 = arith.constant 0.000000e+00 : f32
    %19 = vector.broadcast %cst_9 : f32 to vector<64x32xf32>
    %20 = arith.maximumf %18, %19 : vector<64x32xf32>
    %21 = vector.shape_cast %20 : vector<64x32xf32> to vector<4x16x32xf32>
    %cst_10 = arith.constant dense<0.000000e+00> : vector<4x32xf32>
    %22 = vector.multi_reduction <add>, %21, %cst_10 [1] : vector<4x16x32xf32> to vector<4x32xf32>
    %23 = vector.shape_cast %22 : vector<4x32xf32> to vector<4x1x32xf32>
    %cst_11 = arith.constant 6.250000e-02 : f32
    %24 = vector.broadcast %cst_11 : f32 to vector<4x1x32xf32>
    %25 = arith.mulf %23, %24 : vector<4x1x32xf32>
    %26 = vector.shape_cast %25 : vector<4x1x32xf32> to vector<4x1x32xf32>
    %27 = vector.broadcast %26 : vector<4x1x32xf32> to vector<4x8x32xf32>
    %28 = vector.shape_cast %27 : vector<4x8x32xf32> to vector<32x32xf32>
    %29 = tpu.concatenate %28, %2 in 1 : vector<32x32xf32>, vector<32x4xf32> -> vector<32x36xf32>
    %cst_12 = arith.constant dense<0.000000e+00> : vector<32x32xf32>
    %30 = tpu.matmul %29, %5, %cst_12 {dimension_numbers = #tpu.dot_dimension_numbers<[1], [0], [0], [1], [0, 0, 1, 1], [], []>} : vector<32x36xf32>, vector<36x32xf32>, vector<32x32xf32> -> vector<32x32xf32>
    %31 = vector.broadcast %8 : vector<1x32xf32> to vector<32x32xf32>
    %32 = arith.addf %30, %31 : vector<32x32xf32>
    %cst_13 = arith.constant 0.000000e+00 : f32
    %33 = vector.broadcast %cst_13 : f32 to vector<32x32xf32>
    %34 = arith.maximumf %32, %33 : vector<32x32xf32>
    %cst_14 = arith.constant dense<0.000000e+00> : vector<32x8xf32>
    %35 = tpu.matmul %34, %6, %cst_14 {dimension_numbers = #tpu.dot_dimension_numbers<[1], [0], [0], [1], [0, 0, 1, 1], [], []>} : vector<32x32xf32>, vector<32x8xf32>, vector<32x8xf32> -> vector<32x8xf32>
    %36 = vector.broadcast %9 : vector<1x8xf32> to vector<32x8xf32>
    %37 = arith.addf %35, %36 : vector<32x8xf32>
    %c0_15 = arith.constant 0 : index
    %c0_16 = arith.constant 0 : index
    %38 = vector.load %arg5[%c0_15, %c0_16] : memref<32x32xf32, #tpu.memory_space<vmem>>, vector<32x32xf32>
    %39 = vector.extract_strided_slice %37 {offsets = [0, 0], sizes = [32, 4], strides = [1, 1]} : vector<32x8xf32> to vector<32x4xf32>
    %cst_17 = arith.constant dense<0.000000e+00> : vector<32x4xf32>
    %40 = tpu.matmul %38, %39, %cst_17 {dimension_numbers = #tpu.dot_dimension_numbers<[1], [0], [0], [1], [0, 0, 1, 1], [], []>} : vector<32x32xf32>, vector<32x4xf32>, vector<32x4xf32> -> vector<32x4xf32>
    %c15 = arith.constant 15 : index
    %c0_18 = arith.constant 0 : index
    %41 = tpu.strided_load %arg1[%c15, %c0_18] {strides = array<i32: 16, 1>} : memref<64x4xf32, #tpu.memory_space<vmem>>, vector<4x4xf32>
    %42 = vector.shape_cast %41 : vector<4x4xf32> to vector<4x1x4xf32>
    %43 = vector.shape_cast %42 : vector<4x1x4xf32> to vector<4x1x4xf32>
    %44 = vector.broadcast %43 : vector<4x1x4xf32> to vector<4x8x4xf32>
    %45 = vector.shape_cast %44 : vector<4x8x4xf32> to vector<32x4xf32>
    %46 = arith.addf %40, %45 : vector<32x4xf32>
    %47 = vector.extract_strided_slice %37 {offsets = [0, 4], sizes = [32, 4], strides = [1, 1]} : vector<32x8xf32> to vector<32x4xf32>
    %48 = tpu.concatenate %46, %47 in 1 : vector<32x4xf32>, vector<32x4xf32> -> vector<32x8xf32>
    %c0_19 = arith.constant 0 : index
    %c0_20 = arith.constant 0 : index
    %49 = vector.load %arg7[%c0_19, %c0_20] : memref<32x8xf32, #tpu.memory_space<vmem>>, vector<32x8xf32>
    tpu.vector_store %arg7[%c0_19, %c0_20], %48 {strides = array<i32>} : memref<32x8xf32, #tpu.memory_space<vmem>>, vector<32x8xf32>,
    return
  }
  func.func @transform_0(%arg0: i32) -> (i32, i32) {
    %c0_i32 = arith.constant 0 : i32
    %c0_i32_0 = arith.constant 0 : i32
    return %arg0, %c0_i32 : i32, i32
  }
  func.func @transform_1(%arg0: i32) -> (i32, i32) {
    %c0_i32 = arith.constant 0 : i32
    %c0_i32_0 = arith.constant 0 : i32
    return %arg0, %c0_i32 : i32, i32
  }
  func.func @transform_2(%arg0: i32) -> (i32, i32) {
    %c0_i32 = arith.constant 0 : i32
    %c0_i32_0 = arith.constant 0 : i32
    return %arg0, %c0_i32 : i32, i32
  }
  func.func @transform_3(%arg0: i32) -> (i32, i32) {
    %c0_i32 = arith.constant 0 : i32
    %c0_i32_0 = arith.constant 0 : i32
    %c0_i32_1 = arith.constant 0 : i32
    return %c0_i32, %c0_i32_0 : i32, i32
  }
  func.func @transform_4(%arg0: i32) -> (i32, i32) {
    %c0_i32 = arith.constant 0 : i32
    %c0_i32_0 = arith.constant 0 : i32
    %c0_i32_1 = arith.constant 0 : i32
    return %c0_i32, %c0_i32_0 : i32, i32
  }
  func.func @transform_5(%arg0: i32) -> (i32, i32) {
    %c0_i32 = arith.constant 0 : i32
    %c0_i32_0 = arith.constant 0 : i32
    %c0_i32_1 = arith.constant 0 : i32
    return %c0_i32, %c0_i32_0 : i32, i32
  }
  func.func @transform_6(%arg0: i32) -> (i32, i32) {
    %c0_i32 = arith.constant 0 : i32
    %c0_i32_0 = arith.constant 0 : i32
    return %arg0, %c0_i32 : i32, i32
  }
}

</mosaic_0001>

<llo_original>
// kernel: tpu_custom_call.1
$region0: #{tpu_custom_call.1}
  #allocation0 [shape = 'u32[]', space=smem, size = 0x4, offset = 0x4, fixed_abs, tag = 'smem constant byte address 0x4 - core index']
  #allocation1 [shape = 'u32[144,128]{1,0:T(1,128)}', space=vmem, size = 0x12000, scoped, tag = 'internal scratch']
  %s0 = inlined_call_operand.vmem [shape: f32[256,4], index: 0, kind: input, shape index: {}]
  %s1 = inlined_call_operand.vmem [shape: f32[256,4], index: 1, kind: input, shape index: {}]
  %s2 = inlined_call_operand.vmem [shape: f32[128,4], index: 2, kind: input, shape index: {}]
  %s3 = inlined_call_operand.vmem [shape: f32[64,1], index: 3, kind: input, shape index: {}]
  %s4 = inlined_call_operand.vmem [shape: f32[32,32], index: 4, kind: input, shape index: {}]
  %s5 = inlined_call_operand.vmem [shape: f32[88,32], index: 5, kind: input, shape index: {}]
  %s6 = inlined_call_operand.vmem [shape: f32[128,8], index: 6, kind: output, shape index: {}]
  %s7 = sld [smem:[#allocation0]]
  $region57: #{tpu_custom_call.1} parent=0
    _
  %s9 = ssub.s32 1, %s7
  %s10 = scalar_select 0, %s9, %s7
  loop: start=0, step=1, limit=6
  $region2: #{tpu_custom_call.1} parent=0 // loop_pre_header
    _
  $region3: #{tpu_custom_call.1} parent=0 // loop_header
    %s12 = sphi 0, %s16
    %p13 = scmp.ge.s32.totalorder %s12, 6
    %s22 = sphi 0, %s24
    %s25 = sphi 0, %s22
    %s26 = sphi 0, %s25
    %s42 = sphi 0, %s26
    %s48 = sphi 0, %s50
    %s51 = sphi 0, %s48
    %s52 = sphi 0, %s51
    %s68 = sphi 0, %s52
    %s74 = sphi 0, %s76
    %s77 = sphi 0, %s74
    %s78 = sphi 0, %s77
    %s94 = sphi 0, %s78
    %s98 = sphi 0, %s98
    %s100 = sphi 0, %s98
    %s101 = sphi 0, %s100
    %s115 = sphi 0, %s101
    %s119 = sphi 0, %s119
    %s121 = sphi 0, %s119
    %s122 = sphi 0, %s121
    %s136 = sphi 0, %s122
    %s140 = sphi 0, %s140
    %s142 = sphi 0, %s140
    %s143 = sphi 0, %s142
    %s157 = sphi 0, %s143
    %s163 = sphi 0, %s165
    %s166 = sphi 0, %s163
    %s167 = sphi 0, %s166
    %s183 = sphi 0, %s167
  $region4: #{tpu_custom_call.1} parent=0 // loop_header_branch
    %15 = sbr.rel (%p13) target = $region8
  $region5: #{tpu_custom_call.1} parent=0 // loop_body
    %s17 = ssub.s32 %s12, 1
    %s18 = ssub.s32 %s12, 2
    %s19 = sadd.s32 %s12, 1
    %s20 = ssub.s32 %s12, %s19
    %p21 = scmp.eq.s32.totalorder %s20, 0
    %s23 = sadd.s32 %s22, 1
    %s24 = scalar_select %p21, %s22, %s23
    %p27 = pneg %p21
    %p28 = scmp.eq.s32.totalorder %s12, 3
    %p29 = por %p27, %p28
    %p30 = scmp.ne.s32.totalorder %s22, %s25
    %p31 = scmp.eq.s32.totalorder %s12, 0
    %p32 = por %p30, %p31
    %p33 = scmp.ne.s32.totalorder %s22, %s25
    %p34 = scmp.eq.s32.totalorder %s17, 3
    %p35 = por %p33, %p34
    %p36 = scmp.ne.s32.totalorder %s25, %s26
    %p37 = scmp.eq.s32.totalorder %s17, 0
    %p38 = por %p36, %p37
    %p39 = scmp.ne.s32.totalorder %s25, %s26
    %p40 = scmp.eq.s32.totalorder %s18, 3
    %p41 = por %p39, %p40
    %p43 = scmp.ne.s32.totalorder %s26, %s42
    %p44 = scmp.eq.s32.totalorder %s18, 0
    %p45 = por %p43, %p44
    %s46 = ssub.s32 %s12, %s19
    %p47 = scmp.eq.s32.totalorder %s46, 0
    %s49 = sadd.s32 %s48, 1
    %s50 = scalar_select %p47, %s48, %s49
    %p53 = pneg %p47
    %p54 = scmp.eq.s32.totalorder %s12, 3
    %p55 = por %p53, %p54
    %p56 = scmp.ne.s32.totalorder %s48, %s51
    %p57 = scmp.eq.s32.totalorder %s12, 0
    %p58 = por %p56, %p57
    %p59 = scmp.ne.s32.totalorder %s48, %s51
    %p60 = scmp.eq.s32.totalorder %s17, 3
    %p61 = por %p59, %p60
    %p62 = scmp.ne.s32.totalorder %s51, %s52
    %p63 = scmp.eq.s32.totalorder %s17, 0
    %p64 = por %p62, %p63
    %p65 = scmp.ne.s32.totalorder %s51, %s52
    %p66 = scmp.eq.s32.totalorder %s18, 3
    %p67 = por %p65, %p66
    %p69 = scmp.ne.s32.totalorder %s52, %s68
    %p70 = scmp.eq.s32.totalorder %s18, 0
    %p71 = por %p69, %p70
    %s72 = ssub.s32 %s12, %s19
    %p73 = scmp.eq.s32.totalorder %s72, 0
    %s75 = sadd.s32 %s74, 1
    %s76 = scalar_select %p73, %s74, %s75
    %p79 = pneg %p73
    %p80 = scmp.eq.s32.totalorder %s12, 3
    %p81 = por %p79, %p80
    %p82 = scmp.ne.s32.totalorder %s74, %s77
    %p83 = scmp.eq.s32.totalorder %s12, 0
    %p84 = por %p82, %p83
    %p85 = scmp.ne.s32.totalorder %s74, %s77
    %p86 = scmp.eq.s32.totalorder %s17, 3
    %p87 = por %p85, %p86
    %p88 = scmp.ne.s32.totalorder %s77, %s78
    %p89 = scmp.eq.s32.totalorder %s17, 0
    %p90 = por %p88, %p89
    %p91 = scmp.ne.s32.totalorder %s77, %s78
    %p92 = scmp.eq.s32.totalorder %s18, 3
    %p93 = por %p91, %p92
    %p95 = scmp.ne.s32.totalorder %s78, %s94
    %p96 = scmp.eq.s32.totalorder %s18, 0
    %p97 = por %p95, %p96
    %s99 = sadd.s32 %s98, 1
    %p102 = scmp.eq.s32.totalorder %s12, 3
    %p103 = scmp.ne.s32.totalorder %s98, %s100
    %p104 = scmp.eq.s32.totalorder %s12, 0
    %p105 = por %p103, %p104
    %p106 = scmp.ne.s32.totalorder %s98, %s100
    %p107 = scmp.eq.s32.totalorder %s17, 3
    %p108 = por %p106, %p107
    %p109 = scmp.ne.s32.totalorder %s100, %s101
    %p110 = scmp.eq.s32.totalorder %s17, 0
    %p111 = por %p109, %p110
    %p112 = scmp.ne.s32.totalorder %s100, %s101
    %p113 = scmp.eq.s32.totalorder %s18, 3
    %p114 = por %p112, %p113
    %p116 = scmp.ne.s32.totalorder %s101, %s115
    %p117 = scmp.eq.s32.totalorder %s18, 0
    %p118 = por %p116, %p117
    %s120 = sadd.s32 %s119, 1
    %p123 = scmp.eq.s32.totalorder %s12, 3
    %p124 = scmp.ne.s32.totalorder %s119, %s121
    %p125 = scmp.eq.s32.totalorder %s12, 0
    %p126 = por %p124, %p125
    %p127 = scmp.ne.s32.totalorder %s119, %s121
    %p128 = scmp.eq.s32.totalorder %s17, 3
    %p129 = por %p127, %p128
    %p130 = scmp.ne.s32.totalorder %s121, %s122
    %p131 = scmp.eq.s32.totalorder %s17, 0
    %p132 = por %p130, %p131
    %p133 = scmp.ne.s32.totalorder %s121, %s122
    %p134 = scmp.eq.s32.totalorder %s18, 3
    %p135 = por %p133, %p134
    %p137 = scmp.ne.s32.totalorder %s122, %s136
    %p138 = scmp.eq.s32.totalorder %s18, 0
    %p139 = por %p137, %p138
    %s141 = sadd.s32 %s140, 1
    %p144 = scmp.eq.s32.totalorder %s12, 3
    %p145 = scmp.ne.s32.totalorder %s140, %s142
    %p146 = scmp.eq.s32.totalorder %s12, 0
    %p147 = por %p145, %p146
    %p148 = scmp.ne.s32.totalorder %s140, %s142
    %p149 = scmp.eq.s32.totalorder %s17, 3
    %p150 = por %p148, %p149
    %p151 = scmp.ne.s32.totalorder %s142, %s143
    %p152 = scmp.eq.s32.totalorder %s17, 0
    %p153 = por %p151, %p152
    %p154 = scmp.ne.s32.totalorder %s142, %s143
    %p155 = scmp.eq.s32.totalorder %s18, 3
    %p156 = por %p154, %p155
    %p158 = scmp.ne.s32.totalorder %s143, %s157
    %p159 = scmp.eq.s32.totalorder %s18, 0
    %p160 = por %p158, %p159
    %s161 = ssub.s32 %s12, %s19
    %p162 = scmp.eq.s32.totalorder %s161, 0
    %s164 = sadd.s32 %s163, 1
    %s165 = scalar_select %p162, %s163, %s164
    %p168 = pneg %p162
    %p169 = scmp.eq.s32.totalorder %s12, 3
    %p170 = por %p168, %p169
    %p171 = scmp.ne.s32.totalorder %s163, %s166
    %p172 = scmp.eq.s32.totalorder %s12, 0
    %p173 = por %p171, %p172
    %p174 = scmp.ne.s32.totalorder %s163, %s166
    %p175 = scmp.eq.s32.totalorder %s17, 3
    %p176 = por %p174, %p175
    %p177 = scmp.ne.s32.totalorder %s166, %s167
    %p178 = scmp.eq.s32.totalorder %s17, 0
    %p179 = por %p177, %p178
    %p180 = scmp.ne.s32.totalorder %s166, %s167
    %p181 = scmp.eq.s32.totalorder %s18, 3
    %p182 = por %p180, %p181
    %p184 = scmp.ne.s32.totalorder %s167, %s183
    %p185 = scmp.eq.s32.totalorder %s18, 0
    %p186 = por %p184, %p185
    %p187 = scmp.le.s32.totalorder 1, %s12
    %p188 = scmp.lt.s32.totalorder %s12, 5
    %p189 = pnand %p187, %p188
    %p190 = pneg %p189
    // Predicated region
    $region9: #{tpu_custom_call.1} parent=5 // pred_check
      _
    $region10: #{tpu_custom_call.1} parent=5 // pred_check_branch
      %192 = sbr.rel (%p189) target = $region12
    $region11: #{tpu_custom_call.1} parent=5 // pred_region
      %s193 = ssub.s32 %s12, 1
      // Predicated region
      $region13: #{tpu_custom_call.1} parent=11 // pred_check
        %p194 = pneg %p111
      $region14: #{tpu_custom_call.1} parent=11 // pred_check_branch
        %196 = sbr.rel (%p194) target = $region16
      $region15: #{tpu_custom_call.1} parent=11 // pred_region
        _
      $region16: #{tpu_custom_call.1} parent=11 // pred_fallthru
        _
      // Predicated region
      $region17: #{tpu_custom_call.1} parent=11 // pred_check
        %p197 = pneg %p132
      $region18: #{tpu_custom_call.1} parent=11 // pred_check_branch
        %199 = sbr.rel (%p197) target = $region20
      $region19: #{tpu_custom_call.1} parent=11 // pred_region
        _
      $region20: #{tpu_custom_call.1} parent=11 // pred_fallthru
        _
      // Predicated region
      $region21: #{tpu_custom_call.1} parent=11 // pred_check
        %p200 = pneg %p153
      $region22: #{tpu_custom_call.1} parent=11 // pred_check_branch
        %202 = sbr.rel (%p200) target = $region24
      $region23: #{tpu_custom_call.1} parent=11 // pred_region
        _
      $region24: #{tpu_custom_call.1} parent=11 // pred_fallthru
        _
    $region12: #{tpu_custom_call.1} parent=5 // pred_fallthru
      _
    %p203 = scmp.lt.s32.totalorder %s12, 4
    // Predicated region
    $region25: #{tpu_custom_call.1} parent=5 // pred_check
      %p204 = pneg %p203
    $region26: #{tpu_custom_call.1} parent=5 // pred_check_branch
      %206 = sbr.rel (%p204) target = $region28
    $region27: #{tpu_custom_call.1} parent=5 // pred_region
      // Predicated region
      $region29: #{tpu_custom_call.1} parent=27 // pred_check
        %p207 = pneg %p32
      $region30: #{tpu_custom_call.1} parent=27 // pred_check_branch
        %209 = sbr.rel (%p207) target = $region32
      $region31: #{tpu_custom_call.1} parent=27 // pred_region
        %s210 = smul.u32 8, %s12
        %p211 = scmp.lt.s32.totalorder %s210, 31
        %s212 = scalar_select %p211, %s210, 31
        %s213 = smul.addr %s212, 8
        %s214 = scalar_lea.vmem %s0, %s213
        %s215 = smul.u32 8, %s12
      $region32: #{tpu_custom_call.1} parent=27 // pred_fallthru
        _
      // Predicated region
      $region33: #{tpu_custom_call.1} parent=27 // pred_check
        %p216 = pneg %p58
      $region34: #{tpu_custom_call.1} parent=27 // pred_check_branch
        %218 = sbr.rel (%p216) target = $region36
      $region35: #{tpu_custom_call.1} parent=27 // pred_region
        %s219 = smul.u32 8, %s12
        %p220 = scmp.lt.s32.totalorder %s219, 31
        %s221 = scalar_select %p220, %s219, 31
        %s222 = smul.addr %s221, 8
        %s223 = scalar_lea.vmem %s1, %s222
        %s224 = smul.u32 8, %s12
      $region36: #{tpu_custom_call.1} parent=27 // pred_fallthru
        _
      // Predicated region
      $region37: #{tpu_custom_call.1} parent=27 // pred_check
        %p225 = pneg %p84
      $region38: #{tpu_custom_call.1} parent=27 // pred_check_branch
        %227 = sbr.rel (%p225) target = $region40
      $region39: #{tpu_custom_call.1} parent=27 // pred_region
        %s228 = smul.u32 4, %s12
        %p229 = scmp.lt.s32.totalorder %s228, 15
        %s230 = scalar_select %p229, %s228, 15
        %s231 = smul.addr %s230, 8
        %s232 = scalar_lea.vmem %s2, %s231
        %s233 = smul.u32 4, %s12
      $region40: #{tpu_custom_call.1} parent=27 // pred_fallthru
        _
    $region28: #{tpu_custom_call.1} parent=5 // pred_fallthru
      _
    %p234 = scmp.le.s32.totalorder 1, %s12
    %p235 = scmp.lt.s32.totalorder %s12, 5
    %p236 = pnand %p234, %p235
    %p237 = pneg %p236
    // Predicated region
    $region41: #{tpu_custom_call.1} parent=5 // pred_check
      _
    $region42: #{tpu_custom_call.1} parent=5 // pred_check_branch
      %239 = sbr.rel (%p236) target = $region44
    $region43: #{tpu_custom_call.1} parent=5 // pred_region
      %s240 = ssub.s32 %s12, 1
      %s241 = smul.u32 8, %s17
      %p242 = scmp.lt.s32.totalorder %s241, 31
      %s243 = scalar_select %p242, %s241, 31
      %s244 = smul.addr %s243, 8
      %s245 = scalar_lea.vmem %s0, %s244
      %p246 = pneg %p38
      %p247 = pneg %p35
      %s248 = smul.u32 8, %s17
      %p249 = scmp.lt.s32.totalorder %s248, 31
      %s250 = scalar_select %p249, %s248, 31
      %s251 = smul.addr %s250, 8
      %s252 = scalar_lea.vmem %s1, %s251
      %p253 = pneg %p64
      %p254 = pneg %p61
      %s255 = smul.u32 4, %s17
      %p256 = scmp.lt.s32.totalorder %s255, 15
      %s257 = scalar_select %p256, %s255, 15
      %s258 = smul.addr %s257, 8
      %s259 = scalar_lea.vmem %s2, %s258
      %p260 = pneg %p90
      %p261 = pneg %p87
      %p262 = pneg %p111
      %p263 = pneg %p108
      %p264 = pneg %p132
      %p265 = pneg %p129
      %p266 = pneg %p153
      %p267 = pneg %p150
      %p268 = pneg %p179
      %p269 = pneg %p176
      %s270 = smul.u32 4, %s17
      %p271 = scmp.lt.s32.totalorder %s270, 15
      %s272 = scalar_select %p271, %s270, 15
      %s273 = smul.addr %s272, 8
      %s274 = scalar_lea.vmem %s6, %s273
      %s275 = smul.u32 8, %s17
      %p276 = scmp.lt.s32.totalorder %s275, 31
      %s277 = scalar_select %p276, %s275, 31
      %s278 = smul.addr %s277, 8
      %s279 = scalar_lea.vmem %s0, %s278
      %s280 = smul.u32 8, %s17
      %s281 = smul.u32 8, %s17
      %p282 = scmp.lt.s32.totalorder %s281, 31
      %s283 = scalar_select %p282, %s281, 31
      %s284 = smul.addr %s283, 8
      %s285 = scalar_lea.vmem %s1, %s284
      %s286 = smul.u32 8, %s17
      %s287 = smul.u32 4, %s17
      %p288 = scmp.lt.s32.totalorder %s287, 15
      %s289 = scalar_select %p288, %s287, 15
      %s290 = smul.addr %s289, 8
      %s291 = scalar_lea.vmem %s2, %s290
      %s292 = smul.u32 4, %s17
      %s293 = smul.u32 4, %s17
      %p294 = scmp.lt.s32.totalorder %s293, 15
      %s295 = scalar_select %p294, %s293, 15
      %s296 = smul.addr %s295, 8
      %s297 = scalar_lea.vmem %s6, %s296
      %s298 = smul.u32 4, %s17
      %v299 = vld [vmem:[%s279] sm:$0xff]
      %v300 = vld [vmem:[%s279 + $0x8] sm:$0xff]
      %v301 = vld [vmem:[%s279 + $0x10] sm:$0xff]
      %v302 = vld [vmem:[%s279 + $0x18] sm:$0xff]
      %v303 = vld [vmem:[%s279 + $0x20] sm:$0xff]
      %v304 = vld [vmem:[%s279 + $0x28] sm:$0xff]
      %v305 = vld [vmem:[%s279 + $0x30] sm:$0xff]
      %v306 = vld [vmem:[%s279 + $0x38] sm:$0xff]
      %v307 = vld [vmem:[%s285] sm:$0xff]
      %v308 = vld [vmem:[%s285 + $0x8] sm:$0xff]
      %v309 = vld [vmem:[%s285 + $0x10] sm:$0xff]
      %v310 = vld [vmem:[%s285 + $0x18] sm:$0xff]
      %v311 = vld [vmem:[%s285 + $0x20] sm:$0xff]
      %v312 = vld [vmem:[%s285 + $0x28] sm:$0xff]
      %v313 = vld [vmem:[%s285 + $0x30] sm:$0xff]
      %v314 = vld [vmem:[%s285 + $0x38] sm:$0xff]
      %v315 = vld [vmem:[%s291] sm:$0xff]
      %v316 = vld [vmem:[%s291 + $0x8] sm:$0xff]
      %v317 = vld [vmem:[%s291 + $0x10] sm:$0xff]
      %v318 = vld [vmem:[%s291 + $0x18] sm:$0xff]
      %v319 = vld [vmem:[%s5] sm:$0xff]
      %v320 = vld [vmem:[%s5 + $0x8] sm:$0xff]
      %v321 = vld [vmem:[%s5 + $0x10] sm:$0xff]
      %v322 = vld [vmem:[%s5 + $0x18] sm:$0xff]
      %v323 = vld [vmem:[%s5 + $0x20] sm:$0xff]
      %v324 = vld [vmem:[%s5 + $0x28] sm:$0xff]
      %v325 = vld [vmem:[%s5 + $0x30] sm:$0xff]
      %v326 = vld [vmem:[%s5 + $0x38] sm:$0xff]
      %v327 = vld [vmem:[%s5 + $0x40] sm:$0xff]
      %v328 = vld [vmem:[%s5 + $0x48] sm:$0xff]
      %v329 = vld [vmem:[%s5 + $0x50] sm:$0xff]
      %v330 = vrot.slane %v299, 7
      %v331 = vrot.slane %v300, 7
      %v332 = vrot.slane %v301, 7
      %v333 = vrot.slane %v302, 7
      %v334 = vrot.slane %v303, 7
      %v335 = vrot.slane %v304, 7
      %v336 = vrot.slane %v305, 7
      %v337 = vrot.slane %v306, 7
      %v338 = vlaneseq
      %v339 = vshrl.u32 %v338, 7
      %vm340 = vcmp.lt.s32.totalorder %v339, 1
      %v341 = vsel %vm340, %v336, %v337
      %v342 = vsel %vm340, %v335, %v336
      %v343 = vsel %vm340, %v334, %v335
      %v344 = vsel %vm340, %v333, %v334
      %v345 = vsel %vm340, %v332, %v333
      %v346 = vsel %vm340, %v331, %v332
      %v347 = vsel %vm340, %v330, %v331
      %v348 = vsel %vm340, %v337, %v330
      %v349 = vsub.f32 %v299, %v348
      %v350 = vsub.f32 %v300, %v347
      %v351 = vsub.f32 %v301, %v346
      %v352 = vsub.f32 %v302, %v345
      %v353 = vsub.f32 %v303, %v344
      %v354 = vsub.f32 %v304, %v343
      %v355 = vsub.f32 %v305, %v342
      %v356 = vsub.f32 %v306, %v341
      %v357 = vld [vmem:[%s3] sm:$0xff]
      %v358 = vld [vmem:[%s3 + $0x8] sm:$0xff]
      %v359 = vld [vmem:[%s3 + $0x10] sm:$0xff]
      %v360 = vld [vmem:[%s3 + $0x18] sm:$0xff]
      %v361 = vld [vmem:[%s3 + $0x20] sm:$0xff]
      %v362 = vld [vmem:[%s3 + $0x28] sm:$0xff]
      %v363 = vld [vmem:[%s3 + $0x30] sm:$0xff]
      %v364 = vld [vmem:[%s3 + $0x38] sm:$0xff]
      %366 = vset.pattern.permute.xlu0 0
      %367 = vperm.xlu0 %366, %v357
      %v368 = vpop.permute.xlu0 %367
      %371 = vset.pattern.permute.xlu0 0
      %372 = vperm.xlu0 %371, %v358
      %v373 = vpop.permute.xlu0 %372
      %376 = vset.pattern.permute.xlu0 0
      %377 = vperm.xlu0 %376, %v359
      %v378 = vpop.permute.xlu0 %377
      %381 = vset.pattern.permute.xlu0 0
      %382 = vperm.xlu0 %381, %v360
      %v383 = vpop.permute.xlu0 %382
      %386 = vset.pattern.permute.xlu0 0
      %387 = vperm.xlu0 %386, %v361
      %v388 = vpop.permute.xlu0 %387
      %391 = vset.pattern.permute.xlu0 0
      %392 = vperm.xlu0 %391, %v362
      %v393 = vpop.permute.xlu0 %392
      %396 = vset.pattern.permute.xlu0 0
      %397 = vperm.xlu0 %396, %v363
      %v398 = vpop.permute.xlu0 %397
      %401 = vset.pattern.permute.xlu0 0
      %402 = vperm.xlu0 %401, %v364
      %v403 = vpop.permute.xlu0 %402
      %v405 = vmul.f32 %v349, %v368
      %v406 = vmul.f32 %v350, %v373
      %v407 = vmul.f32 %v351, %v378
      %v408 = vmul.f32 %v352, %v383
      %v409 = vmul.f32 %v353, %v388
      %v410 = vmul.f32 %v354, %v393
      %v411 = vmul.f32 %v355, %v398
      %v412 = vmul.f32 %v356, %v403
      %421 = vrot.lane.b32.xlu0 %v307, 4
      %v422 = vpop.permute.xlu0 %421
      %423 = vrot.lane.b32.xlu0 %v308, 4
      %v424 = vpop.permute.xlu0 %423
      %425 = vrot.lane.b32.xlu0 %v309, 4
      %v426 = vpop.permute.xlu0 %425
      %427 = vrot.lane.b32.xlu0 %v310, 4
      %v428 = vpop.permute.xlu0 %427
      %429 = vrot.lane.b32.xlu0 %v311, 4
      %v430 = vpop.permute.xlu0 %429
      %431 = vrot.lane.b32.xlu0 %v312, 4
      %v432 = vpop.permute.xlu0 %431
      %433 = vrot.lane.b32.xlu0 %v313, 4
      %v434 = vpop.permute.xlu0 %433
      %435 = vrot.lane.b32.xlu0 %v314, 4
      %v436 = vpop.permute.xlu0 %435
      %vm445 = vcmask 31744
      %v446 = vsel %vm445, %v405, %v422
      %v447 = vsel %vm445, %v406, %v424
      %v448 = vsel %vm445, %v407, %v426
      %v449 = vsel %vm445, %v408, %v428
      %v450 = vsel %vm445, %v409, %v430
      %v451 = vsel %vm445, %v410, %v432
      %v452 = vsel %vm445, %v411, %v434
      %v453 = vsel %vm445, %v412, %v436
      %v454 = vlaneseq
      %v455 = vshrl.u32 %v454, 7
      %v456 = vsub.s32 0, %v455
      %v457 = vrot.slane %v329, %v456
      %vm458 = vcmask 64512
      %v460 = vsel %vm458, %v446, 0
      %v463 = vsel %vm458, %v447, 0
      %v466 = vsel %vm458, %v448, 0
      %v469 = vsel %vm458, %v449, 0
      %v472 = vsel %vm458, %v450, 0
      %v475 = vsel %vm458, %v451, 0
      %v478 = vsel %vm458, %v452, 0
      %v481 = vsel %vm458, %v453, 0
      %483 = vmatprep.subr.mxu0 0.0
      %484 = vmatpush1.msra.mxu0 %v319
      %485 = vmatprep.subr.mxu0 0.0
      %486 = vmatpush1.msra.mxu0 0.0
      %487 = vmatprep.subr.mxu0 0.0
      %488 = vmatpush1.msra.mxu0 0.0
      %489 = vmatprep.subr.mxu0 0.0
      %490 = vmatpush1.msra.mxu0 0.0
      %491 = vmatprep.subr.mxu0 0.0
      %492 = vmatpush1.msra.mxu0 0.0
      %493 = vmatprep.subr.mxu0 0.0
      %494 = vmatpush1.msra.mxu0 0.0
      %495 = vmatprep.subr.mxu0 0.0
      %496 = vmatpush1.msra.mxu0 0.0
      %497 = vmatprep.subr.mxu0 0.0
      %498 = vmatpush1.msra.mxu0 0.0
      %499 = vmatprep.subr.mxu0 0.0
      %500 = vmatpush1.msra.mxu0 0.0
      %501 = vmatprep.subr.mxu0 0.0
      %502 = vmatpush1.msra.mxu0 0.0
      %503 = vmatprep.subr.mxu0 0.0
      %504 = vmatpush1.msra.mxu0 0.0
      %505 = vmatprep.subr.mxu0 0.0
      %506 = vmatpush1.msra.mxu0 0.0
      %507 = vmatprep.subr.mxu0 0.0
      %508 = vmatpush1.msra.mxu0 0.0
      %509 = vmatprep.subr.mxu0 0.0
      %510 = vmatpush1.msra.mxu0 0.0
      %511 = vmatprep.subr.mxu0 0.0
      %512 = vmatpush1.msra.mxu0 0.0
      %513 = vmatprep.subr.mxu0 0.0
      %514 = vmatpush1.msra.mxu0 0.0
      %515 = vmatprep.subr.mxu0 0.0
      %516 = vmatpush1.msra.mxu0 0.0
      %517 = vmatprep.subr.mxu0 0.0
      %518 = vmatpush1.msra.mxu0 0.0
      %519 = vmatprep.subr.mxu0 0.0
      %520 = vmatpush1.msra.mxu0 0.0
      %521 = vmatprep.subr.mxu0 0.0
      %522 = vmatpush1.msra.mxu0 0.0
      %523 = vmatprep.subr.mxu0 0.0
      %524 = vmatpush1.msra.mxu0 0.0
      %525 = vmatprep.subr.mxu0 0.0
      %526 = vmatpush1.msra.mxu0 0.0
      %527 = vmatprep.subr.mxu0 0.0
      %528 = vmatpush1.msra.mxu0 0.0
      %529 = vmatprep.subr.mxu0 0.0
      %530 = vmatpush1.msra.mxu0 0.0
      %531 = vmatprep.subr.mxu0 0.0
      %532 = vmatpush1.msra.mxu0 0.0
      %533 = vmatprep.subr.mxu0 0.0
      %534 = vmatpush1.msra.mxu0 0.0
      %535 = vmatprep.subr.mxu0 0.0
      %536 = vmatpush1.msra.mxu0 0.0
      %537 = vmatprep.subr.mxu0 0.0
      %538 = vmatpush1.msra.mxu0 0.0
      %539 = vmatprep.subr.mxu0 0.0
      %540 = vmatpush1.msra.mxu0 0.0
      %541 = vmatprep.subr.mxu0 0.0
      %542 = vmatpush1.msra.mxu0 0.0
      %543 = vmatprep.subr.mxu0 0.0
      %544 = vmatpush1.msra.mxu0 0.0
      %545 = vmatprep.subr.mxu0 0.0
      %546 = vmatpush1.msra.mxu0 0.0
      %547 = vmatprep.mubr.f32.mxu0 0.0
      %548 = vmatmul.mubr.f32.gmra.mrb[0].mxu0 %v460
      %v549 = vpop.f32.mrb[0].mxu0
      %v550 = vadd.f32 %v457, %v549
      %v551 = vpop.f32.mrb[0].mxu0
      %552 = vmatprep.mubr.f32.mxu0 0.0
      %553 = vmatmul.mubr.f32.gmra.mrb[0].mxu0 %v463
      %v554 = vpop.f32.mrb[0].mxu0
      %v555 = vadd.f32 %v457, %v554
      %v556 = vpop.f32.mrb[0].mxu0
      %557 = vmatprep.mubr.f32.mxu0 0.0
      %558 = vmatmul.mubr.f32.gmra.mrb[0].mxu0 %v466
      %v559 = vpop.f32.mrb[0].mxu0
      %v560 = vadd.f32 %v457, %v559
      %v561 = vpop.f32.mrb[0].mxu0
      %562 = vmatprep.mubr.f32.mxu0 0.0
      %563 = vmatmul.mubr.f32.gmra.mrb[0].mxu0 %v469
      %v564 = vpop.f32.mrb[0].mxu0
      %v565 = vadd.f32 %v457, %v564
      %v566 = vpop.f32.mrb[0].mxu0
      %567 = vmatprep.mubr.f32.mxu0 0.0
      %568 = vmatmul.mubr.f32.gmra.mrb[0].mxu0 %v472
      %v569 = vpop.f32.mrb[0].mxu0
      %v570 = vadd.f32 %v457, %v569
      %v571 = vpop.f32.mrb[0].mxu0
      %572 = vmatprep.mubr.f32.mxu0 0.0
      %573 = vmatmul.mubr.f32.gmra.mrb[0].mxu0 %v475
      %v574 = vpop.f32.mrb[0].mxu0
      %v575 = vadd.f32 %v457, %v574
      %v576 = vpop.f32.mrb[0].mxu0
      %577 = vmatprep.mubr.f32.mxu0 0.0
      %578 = vmatmul.mubr.f32.gmra.mrb[0].mxu0 %v478
      %v579 = vpop.f32.mrb[0].mxu0
      %v580 = vadd.f32 %v457, %v579
      %v581 = vpop.f32.mrb[0].mxu0
      %582 = vmatprep.mubr.f32.mxu0 0.0
      %583 = vmatmul.mubr.f32.gmra.mrb[0].mxu0 %v481
      %v584 = vpop.f32.mrb[0].mxu0
      %v585 = vadd.f32 %v457, %v584
      %v586 = vpop.f32.mrb[0].mxu0
      %587 = vdwg.mxu0
      %v588 = vmax.f32 %v550, 0.0
      %v589 = vmax.f32 %v555, 0.0
      %v590 = vmax.f32 %v560, 0.0
      %v591 = vmax.f32 %v565, 0.0
      %v592 = vmax.f32 %v570, 0.0
      %v593 = vmax.f32 %v575, 0.0
      %v594 = vmax.f32 %v580, 0.0
      %v595 = vmax.f32 %v585, 0.0
      %vm596 = vcmask 261120
      %v597 = vsel %vm596, %v588, 0.0
      %v598 = vsel %vm596, %v589, 0.0
      %v599 = vadd.f32 %v597, %v598
      %v600 = vrot.slane %v599, 4
      %v601 = vadd.f32 %v599, %v600
      %v602 = vrot.slane %v601, 2
      %v603 = vadd.f32 %v601, %v602
      %v604 = vrot.slane %v603, 1
      %v605 = vadd.f32 %v603, %v604
      %v606 = vsel %vm596, %v590, 0.0
      %v607 = vsel %vm596, %v591, 0.0
      %v608 = vadd.f32 %v606, %v607
      %v609 = vrot.slane %v608, 4
      %v610 = vadd.f32 %v608, %v609
      %v611 = vrot.slane %v610, 2
      %v612 = vadd.f32 %v610, %v611
      %v613 = vrot.slane %v612, 1
      %v614 = vadd.f32 %v612, %v613
      %v615 = vsel %vm596, %v592, 0.0
      %v616 = vsel %vm596, %v593, 0.0
      %v617 = vadd.f32 %v615, %v616
      %v618 = vrot.slane %v617, 4
      %v619 = vadd.f32 %v617, %v618
      %v620 = vrot.slane %v619, 2
      %v621 = vadd.f32 %v619, %v620
      %v622 = vrot.slane %v621, 1
      %v623 = vadd.f32 %v621, %v622
      %v624 = vsel %vm596, %v594, 0.0
      %v625 = vsel %vm596, %v595, 0.0
      %v626 = vadd.f32 %v624, %v625
      %v627 = vrot.slane %v626, 4
      %v628 = vadd.f32 %v626, %v627
      %v629 = vrot.slane %v628, 2
      %v630 = vadd.f32 %v628, %v629
      %v631 = vrot.slane %v630, 1
      %v632 = vadd.f32 %v630, %v631
      %v633 = vmul.f32 %v605, 0.0625
      %v634 = vmul.f32 %v614, 0.0625
      %v635 = vmul.f32 %v623, 0.0625
      %v636 = vmul.f32 %v632, 0.0625
      %641 = vrot.lane.b32.xlu0 %v315, 32
      %v642 = vpop.permute.xlu0 %641
      %643 = vrot.lane.b32.xlu0 %v316, 32
      %v644 = vpop.permute.xlu0 %643
      %645 = vrot.lane.b32.xlu0 %v317, 32
      %v646 = vpop.permute.xlu0 %645
      %647 = vrot.lane.b32.xlu0 %v318, 32
      %v648 = vpop.permute.xlu0 %647
      %v653 = vsel %vm596, %v633, %v642
      %v654 = vsel %vm596, %v634, %v644
      %v655 = vsel %vm596, %v635, %v646
      %v656 = vsel %vm596, %v636, %v648
      %v657 = vlaneseq
      %v658 = vshrl.u32 %v657, 7
      %v659 = vsub.s32 1, %v658
      %v660 = vrot.slane %v329, %v659
      %vm661 = vcmask 293888
      %v663 = vsel %vm661, %v653, 0
      %v666 = vsel %vm661, %v654, 0
      %v669 = vsel %vm661, %v655, 0
      %v672 = vsel %vm661, %v656, 0
      %vm674 = vcmask 1043456
      %v676 = vsel %vm674, %v324, 0
      %678 = vmatprep.subr.mxu0 0.0
      %679 = vmatpush1.msra.mxu0 %v320
      %680 = vmatprep.subr.mxu0 0.0
      %681 = vmatpush1.msra.mxu0 %v321
      %682 = vmatprep.subr.mxu0 0.0
      %683 = vmatpush1.msra.mxu0 %v322
      %684 = vmatprep.subr.mxu0 0.0
      %685 = vmatpush1.msra.mxu0 %v323
      %686 = vmatprep.subr.mxu0 0.0
      %687 = vmatpush1.msra.mxu0 %v676
      %688 = vmatprep.subr.mxu0 0.0
      %689 = vmatpush1.msra.mxu0 0.0
      %690 = vmatprep.subr.mxu0 0.0
      %691 = vmatpush1.msra.mxu0 0.0
      %692 = vmatprep.subr.mxu0 0.0
      %693 = vmatpush1.msra.mxu0 0.0
      %694 = vmatprep.subr.mxu0 0.0
      %695 = vmatpush1.msra.mxu0 0.0
      %696 = vmatprep.subr.mxu0 0.0
      %697 = vmatpush1.msra.mxu0 0.0
      %698 = vmatprep.subr.mxu0 0.0
      %699 = vmatpush1.msra.mxu0 0.0
      %700 = vmatprep.subr.mxu0 0.0
      %701 = vmatpush1.msra.mxu0 0.0
      %702 = vmatprep.subr.mxu0 0.0
      %703 = vmatpush1.msra.mxu0 0.0
      %704 = vmatprep.subr.mxu0 0.0
      %705 = vmatpush1.msra.mxu0 0.0
      %706 = vmatprep.subr.mxu0 0.0
      %707 = vmatpush1.msra.mxu0 0.0
      %708 = vmatprep.subr.mxu0 0.0
      %709 = vmatpush1.msra.mxu0 0.0
      %710 = vmatprep.subr.mxu0 0.0
      %711 = vmatpush1.msra.mxu0 0.0
      %712 = vmatprep.subr.mxu0 0.0
      %713 = vmatpush1.msra.mxu0 0.0
      %714 = vmatprep.subr.mxu0 0.0
      %715 = vmatpush1.msra.mxu0 0.0
      %716 = vmatprep.subr.mxu0 0.0
      %717 = vmatpush1.msra.mxu0 0.0
      %718 = vmatprep.subr.mxu0 0.0
      %719 = vmatpush1.msra.mxu0 0.0
      %720 = vmatprep.subr.mxu0 0.0
      %721 = vmatpush1.msra.mxu0 0.0
      %722 = vmatprep.subr.mxu0 0.0
      %723 = vmatpush1.msra.mxu0 0.0
      %724 = vmatprep.subr.mxu0 0.0
      %725 = vmatpush1.msra.mxu0 0.0
      %726 = vmatprep.subr.mxu0 0.0
      %727 = vmatpush1.msra.mxu0 0.0
      %728 = vmatprep.subr.mxu0 0.0
      %729 = vmatpush1.msra.mxu0 0.0
      %730 = vmatprep.subr.mxu0 0.0
      %731 = vmatpush1.msra.mxu0 0.0
      %732 = vmatprep.subr.mxu0 0.0
      %733 = vmatpush1.msra.mxu0 0.0
      %734 = vmatprep.subr.mxu0 0.0
      %735 = vmatpush1.msra.mxu0 0.0
      %736 = vmatprep.subr.mxu0 0.0
      %737 = vmatpush1.msra.mxu0 0.0
      %738 = vmatprep.subr.mxu0 0.0
      %739 = vmatpush1.msra.mxu0 0.0
      %740 = vmatprep.subr.mxu0 0.0
      %741 = vmatpush1.msra.mxu0 0.0
      %742 = vmatprep.mubr.f32.mxu0 0.0
      %743 = vmatmul.mubr.f32.gmra.mrb[0].mxu0 %v663
      %v744 = vpop.f32.mrb[0].mxu0
      %v745 = vadd.f32 %v660, %v744
      %v746 = vpop.f32.mrb[0].mxu0
      %747 = vmatprep.mubr.f32.mxu0 0.0
      %748 = vmatmul.mubr.f32.gmra.mrb[0].mxu0 %v666
      %v749 = vpop.f32.mrb[0].mxu0
      %v750 = vadd.f32 %v660, %v749
      %v751 = vpop.f32.mrb[0].mxu0
      %752 = vmatprep.mubr.f32.mxu0 0.0
      %753 = vmatmul.mubr.f32.gmra.mrb[0].mxu0 %v669
      %v754 = vpop.f32.mrb[0].mxu0
      %v755 = vadd.f32 %v660, %v754
      %v756 = vpop.f32.mrb[0].mxu0
      %757 = vmatprep.mubr.f32.mxu0 0.0
      %758 = vmatmul.mubr.f32.gmra.mrb[0].mxu0 %v672
      %v759 = vpop.f32.mrb[0].mxu0
      %v760 = vadd.f32 %v660, %v759
      %v761 = vpop.f32.mrb[0].mxu0
      %762 = vdwg.mxu0
      %v763 = vmax.f32 %v745, 0.0
      %v764 = vmax.f32 %v750, 0.0
      %v765 = vmax.f32 %v755, 0.0
      %v766 = vmax.f32 %v760, 0.0
      %v767 = vlaneseq
      %v768 = vshrl.u32 %v767, 7
      %v769 = vsub.s32 2, %v768
      %v770 = vrot.slane %v329, %v769
      %v772 = vsel %vm596, %v763, 0
      %v775 = vsel %vm596, %v764, 0
      %v778 = vsel %vm596, %v765, 0
      %v781 = vsel %vm596, %v766, 0
      %783 = vmatprep.subr.mxu0 0.0
      %784 = vmatpush1.msra.mxu0 %v325
      %785 = vmatprep.subr.mxu0 0.0
      %786 = vmatpush1.msra.mxu0 %v326
      %787 = vmatprep.subr.mxu0 0.0
      %788 = vmatpush1.msra.mxu0 %v327
      %789 = vmatprep.subr.mxu0 0.0
      %790 = vmatpush1.msra.mxu0 %v328
      %791 = vmatprep.subr.mxu0 0.0
      %792 = vmatpush1.msra.mxu0 0.0
      %793 = vmatprep.subr.mxu0 0.0
      %794 = vmatpush1.msra.mxu0 0.0
      %795 = vmatprep.subr.mxu0 0.0
      %796 = vmatpush1.msra.mxu0 0.0
      %797 = vmatprep.subr.mxu0 0.0
      %798 = vmatpush1.msra.mxu0 0.0
      %799 = vmatprep.subr.mxu0 0.0
      %800 = vmatpush1.msra.mxu0 0.0
      %801 = vmatprep.subr.mxu0 0.0
      %802 = vmatpush1.msra.mxu0 0.0
      %803 = vmatprep.subr.mxu0 0.0
      %804 = vmatpush1.msra.mxu0 0.0
      %805 = vmatprep.subr.mxu0 0.0
      %806 = vmatpush1.msra.mxu0 0.0
      %807 = vmatprep.subr.mxu0 0.0
      %808 = vmatpush1.msra.mxu0 0.0
      %809 = vmatprep.subr.mxu0 0.0
      %810 = vmatpush1.msra.mxu0 0.0
      %811 = vmatprep.subr.mxu0 0.0
      %812 = vmatpush1.msra.mxu0 0.0
      %813 = vmatprep.subr.mxu0 0.0
      %814 = vmatpush1.msra.mxu0 0.0
      %815 = vmatprep.subr.mxu0 0.0
      %816 = vmatpush1.msra.mxu0 0.0
      %817 = vmatprep.subr.mxu0 0.0
      %818 = vmatpush1.msra.mxu0 0.0
      %819 = vmatprep.subr.mxu0 0.0
      %820 = vmatpush1.msra.mxu0 0.0
      %821 = vmatprep.subr.mxu0 0.0
      %822 = vmatpush1.msra.mxu0 0.0
      %823 = vmatprep.subr.mxu0 0.0
      %824 = vmatpush1.msra.mxu0 0.0
      %825 = vmatprep.subr.mxu0 0.0
      %826 = vmatpush1.msra.mxu0 0.0
      %827 = vmatprep.subr.mxu0 0.0
      %828 = vmatpush1.msra.mxu0 0.0
      %829 = vmatprep.subr.mxu0 0.0
      %830 = vmatpush1.msra.mxu0 0.0
      %831 = vmatprep.subr.mxu0 0.0
      %832 = vmatpush1.msra.mxu0 0.0
      %833 = vmatprep.subr.mxu0 0.0
      %834 = vmatpush1.msra.mxu0 0.0
      %835 = vmatprep.subr.mxu0 0.0
      %836 = vmatpush1.msra.mxu0 0.0
      %837 = vmatprep.subr.mxu0 0.0
      %838 = vmatpush1.msra.mxu0 0.0
      %839 = vmatprep.subr.mxu0 0.0
      %840 = vmatpush1.msra.mxu0 0.0
      %841 = vmatprep.subr.mxu0 0.0
      %842 = vmatpush1.msra.mxu0 0.0
      %843 = vmatprep.subr.mxu0 0.0
      %844 = vmatpush1.msra.mxu0 0.0
      %845 = vmatprep.subr.mxu0 0.0
      %846 = vmatpush1.msra.mxu0 0.0
      %847 = vmatprep.mubr.f32.mxu0 0.0
      %848 = vmatmul.mubr.f32.gmra.mrb[0].mxu0 %v772
      %v849 = vpop.f32.mrb[0].mxu0
      %v850 = vadd.f32 %v770, %v849
      %v851 = vpop.f32.mrb[0].mxu0
      %852 = vmatprep.mubr.f32.mxu0 0.0
      %853 = vmatmul.mubr.f32.gmra.mrb[0].mxu0 %v775
      %v854 = vpop.f32.mrb[0].mxu0
      %v855 = vadd.f32 %v770, %v854
      %v856 = vpop.f32.mrb[0].mxu0
      %857 = vmatprep.mubr.f32.mxu0 0.0
      %858 = vmatmul.mubr.f32.gmra.mrb[0].mxu0 %v778
      %v859 = vpop.f32.mrb[0].mxu0
      %v860 = vadd.f32 %v770, %v859
      %v861 = vpop.f32.mrb[0].mxu0
      %862 = vmatprep.mubr.f32.mxu0 0.0
      %863 = vmatmul.mubr.f32.gmra.mrb[0].mxu0 %v781
      %v864 = vpop.f32.mrb[0].mxu0
      %v865 = vadd.f32 %v770, %v864
      %v866 = vpop.f32.mrb[0].mxu0
      %867 = vdwg.mxu0
      %v868 = vld [vmem:[%s4] sm:$0xff]
      %v869 = vld [vmem:[%s4 + $0x8] sm:$0xff]
      %v870 = vld [vmem:[%s4 + $0x10] sm:$0xff]
      %v871 = vld [vmem:[%s4 + $0x18] sm:$0xff]
      %s872 = scalar_lea.vmem %s279, 15
      %v873 = vld [vmem:[%s872] ss:$16 sm:$0x3]
      %v874 = vld [vmem:[%s872] ss:$16 sm:$0xc]
      %v875 = vor.u32 %v873, %v874
      %v878 = vunpack.c.l.s4 1966171168
      %v879 = vunpack.c.0.s8 %v878
      %v880 = vlaneseq
      %v881 = vshrl.u32 %v880, 7
      %v882 = vsub.s32 %v879, %v881
      %v883 = vrot.slane %v875, %v882
      %v884 = vcombine.high %v883, %v883
      %v886 = vunpack.c.l.s4 1966171168
      %v887 = vunpack.c.0.s8 %v886
      %v888 = vlaneseq
      %v889 = vshrl.u32 %v888, 7
      %v890 = vsub.s32 %v887, %v889
      %v891 = vrot.slane %v883, %v890
      %v893 = vunpack.c.l.s4 1966171168
      %v894 = vunpack.c.0.s8 %v893
      %v895 = vlaneseq
      %v896 = vshrl.u32 %v895, 7
      %v897 = vsub.s32 %v894, %v896
      %v898 = vrot.slane %v884, %v897
      %v899 = vcombine.high %v891, %v891
      %v900 = vcombine.high %v898, %v898
      %v901 = vlaneseq
      %v902 = vshrl.u32 %v901, 7
      %v903 = vsub.s32 0, %v902
      %v904 = vrot.slane %v891, %v903
      %v905 = vlaneseq
      %v906 = vshrl.u32 %v905, 7
      %v907 = vsub.s32 0, %v906
      %v908 = vrot.slane %v898, %v907
      %v909 = vlaneseq
      %v910 = vshrl.u32 %v909, 7
      %v911 = vsub.s32 0, %v910
      %v912 = vrot.slane %v899, %v911
      %v913 = vlaneseq
      %v914 = vshrl.u32 %v913, 7
      %v915 = vsub.s32 0, %v914
      %v916 = vrot.slane %v900, %v915
      %v922 = vsel %vm596, %v868, 0
      %v925 = vsel %vm596, %v869, 0
      %v928 = vsel %vm596, %v870, 0
      %v931 = vsel %vm596, %v871, 0
      %933 = vmatprep.subr.mxu0 0.0
      %934 = vmatpush1.msra.mxu0 %v850
      %935 = vmatprep.subr.mxu0 0.0
      %936 = vmatpush1.msra.mxu0 %v855
      %937 = vmatprep.subr.mxu0 0.0
      %938 = vmatpush1.msra.mxu0 %v860
      %939 = vmatprep.subr.mxu0 0.0
      %940 = vmatpush1.msra.mxu0 %v865
      %941 = vmatprep.subr.mxu0 0.0
      %942 = vmatpush1.msra.mxu0 0.0
      %943 = vmatprep.subr.mxu0 0.0
      %944 = vmatpush1.msra.mxu0 0.0
      %945 = vmatprep.subr.mxu0 0.0
      %946 = vmatpush1.msra.mxu0 0.0
      %947 = vmatprep.subr.mxu0 0.0
      %948 = vmatpush1.msra.mxu0 0.0
      %949 = vmatprep.subr.mxu0 0.0
      %950 = vmatpush1.msra.mxu0 0.0
      %951 = vmatprep.subr.mxu0 0.0
      %952 = vmatpush1.msra.mxu0 0.0
      %953 = vmatprep.subr.mxu0 0.0
      %954 = vmatpush1.msra.mxu0 0.0
      %955 = vmatprep.subr.mxu0 0.0
      %956 = vmatpush1.msra.mxu0 0.0
      %957 = vmatprep.subr.mxu0 0.0
      %958 = vmatpush1.msra.mxu0 0.0
      %959 = vmatprep.subr.mxu0 0.0
      %960 = vmatpush1.msra.mxu0 0.0
      %961 = vmatprep.subr.mxu0 0.0
      %962 = vmatpush1.msra.mxu0 0.0
      %963 = vmatprep.subr.mxu0 0.0
      %964 = vmatpush1.msra.mxu0 0.0
      %965 = vmatprep.subr.mxu0 0.0
      %966 = vmatpush1.msra.mxu0 0.0
      %967 = vmatprep.subr.mxu0 0.0
      %968 = vmatpush1.msra.mxu0 0.0
      %969 = vmatprep.subr.mxu0 0.0
      %970 = vmatpush1.msra.mxu0 0.0
      %971 = vmatprep.subr.mxu0 0.0
      %972 = vmatpush1.msra.mxu0 0.0
      %973 = vmatprep.subr.mxu0 0.0
      %974 = vmatpush1.msra.mxu0 0.0
      %975 = vmatprep.subr.mxu0 0.0
      %976 = vmatpush1.msra.mxu0 0.0
      %977 = vmatprep.subr.mxu0 0.0
      %978 = vmatpush1.msra.mxu0 0.0
      %979 = vmatprep.subr.mxu0 0.0
      %980 = vmatpush1.msra.mxu0 0.0
      %981 = vmatprep.subr.mxu0 0.0
      %982 = vmatpush1.msra.mxu0 0.0
      %983 = vmatprep.subr.mxu0 0.0
      %984 = vmatpush1.msra.mxu0 0.0
      %985 = vmatprep.subr.mxu0 0.0
      %986 = vmatpush1.msra.mxu0 0.0
      %987 = vmatprep.subr.mxu0 0.0
      %988 = vmatpush1.msra.mxu0 0.0
      %989 = vmatprep.subr.mxu0 0.0
      %990 = vmatpush1.msra.mxu0 0.0
      %991 = vmatprep.subr.mxu0 0.0
      %992 = vmatpush1.msra.mxu0 0.0
      %993 = vmatprep.subr.mxu0 0.0
      %994 = vmatpush1.msra.mxu0 0.0
      %995 = vmatprep.subr.mxu0 0.0
      %996 = vmatpush1.msra.mxu0 0.0
      %997 = vmatprep.mubr.f32.mxu0 0.0
      %998 = vmatmul.mubr.f32.gmra.mrb[0].mxu0 %v922
      %v999 = vpop.f32.mrb[0].mxu0
      %v1000 = vadd.f32 %v904, %v999
      %v1001 = vpop.f32.mrb[0].mxu0
      %1002 = vmatprep.mubr.f32.mxu0 0.0
      %1003 = vmatmul.mubr.f32.gmra.mrb[0].mxu0 %v925
      %v1004 = vpop.f32.mrb[0].mxu0
      %v1005 = vadd.f32 %v908, %v1004
      %v1006 = vpop.f32.mrb[0].mxu0
      %1007 = vmatprep.mubr.f32.mxu0 0.0
      %1008 = vmatmul.mubr.f32.gmra.mrb[0].mxu0 %v928
      %v1009 = vpop.f32.mrb[0].mxu0
      %v1010 = vadd.f32 %v912, %v1009
      %v1011 = vpop.f32.mrb[0].mxu0
      %1012 = vmatprep.mubr.f32.mxu0 0.0
      %1013 = vmatmul.mubr.f32.gmra.mrb[0].mxu0 %v931
      %v1014 = vpop.f32.mrb[0].mxu0
      %v1015 = vadd.f32 %v916, %v1014
      %v1016 = vpop.f32.mrb[0].mxu0
      %1017 = vdwg.mxu0
      %v1018 = vsel %vm445, %v1000, %v850
      %v1019 = vsel %vm445, %v1005, %v855
      %v1020 = vsel %vm445, %v1010, %v860
      %v1021 = vsel %vm445, %v1015, %v865
      %1022 = vst.msk [vmem:[%s297] sm:$0xff] %vm458, %v1018
      %1023 = vst.msk [vmem:[%s297 + $0x8] sm:$0xff] %vm458, %v1019
      %1024 = vst.msk [vmem:[%s297 + $0x10] sm:$0xff] %vm458, %v1020
      %1025 = vst.msk [vmem:[%s297 + $0x18] sm:$0xff] %vm458, %v1021
      %s1026 = smul.u32 4, %s17
      %p1027 = scmp.lt.s32.totalorder %s1026, 15
      %s1028 = scalar_select %p1027, %s1026, 15
      %s1029 = smul.addr %s1028, 8
      %s1030 = scalar_lea.vmem %s6, %s1029
      // Predicated region
      $region45: #{tpu_custom_call.1} parent=43 // pred_check
        %p1031 = pneg %p176
      $region46: #{tpu_custom_call.1} parent=43 // pred_check_branch
        %1033 = sbr.rel (%p1031) target = $region48
      $region47: #{tpu_custom_call.1} parent=43 // pred_region
        %s1034 = smul.u32 4, %s17
      $region48: #{tpu_custom_call.1} parent=43 // pred_fallthru
        _
    $region44: #{tpu_custom_call.1} parent=5 // pred_fallthru
      _
    %p1035 = scmp.le.s32.totalorder 2, %s12
    // Predicated region
    $region49: #{tpu_custom_call.1} parent=5 // pred_check
      %p1036 = pneg %p1035
    $region50: #{tpu_custom_call.1} parent=5 // pred_check_branch
      %1038 = sbr.rel (%p1036) target = $region52
    $region51: #{tpu_custom_call.1} parent=5 // pred_region
      %s1039 = ssub.s32 %s12, 2
      // Predicated region
      $region53: #{tpu_custom_call.1} parent=51 // pred_check
        %p1040 = pneg %p182
      $region54: #{tpu_custom_call.1} parent=51 // pred_check_branch
        %1042 = sbr.rel (%p1040) target = $region56
      $region55: #{tpu_custom_call.1} parent=51 // pred_region
        %s1043 = smul.u32 4, %s18
        %p1044 = scmp.lt.s32.totalorder %s1043, 15
        %s1045 = scalar_select %p1044, %s1043, 15
        %s1046 = smul.addr %s1045, 8
        %s1047 = scalar_lea.vmem %s6, %s1046
      $region56: #{tpu_custom_call.1} parent=51 // pred_fallthru
        _
    $region52: #{tpu_custom_call.1} parent=5 // pred_fallthru
      _
  $region6: #{tpu_custom_call.1} parent=0 // loop_footer
    %s16 = sadd.s32 1, %s12
  $region7: #{tpu_custom_call.1} parent=0 // loop_footer_branch
    %11 = sbr.rel target = $region3
  $region8: #{tpu_custom_call.1} parent=0 // loop_exit
    _

</llo_original>
